<compile_context>
chip_gen: v7x
topology: tpu7x:2x2x1
jax: 0.10.0
libtpu: 0.0.40
codegen_flags: <defaults>
</compile_context>

<pallas_src>
import functools

import jax
import jax.numpy as jnp
import numpy as np
from jax.experimental import pallas as pl
from jax.experimental.pallas import tpu as pltpu

_LANE = 1024            # lane-dim width of the 2-D stream view (multiple of 128)
_ROW_QUANT = 8          # rows quantized to the sublane multiple
_BLOCK_ROWS_MAX = 512   # (512, 1024) f32 = 2 MiB block; ~HBM roofline, VMEM-safe
_NUM_CORES = 2          # leading "parallel" grid axis (both TCs on v7x)


# ----------------------------------------------------------------------------
# Kernels
# ----------------------------------------------------------------------------

def _scalar_step_kernel(s_ref, total_ref, count_ref, t_out, c_out, v_out):
    """One forward() step: conditionally accumulate a single scalar."""
    s = s_ref[...].astype(jnp.float32)                       # (1, 1)
    nz = s != 0.0
    new_t = total_ref[...] + jnp.where(nz, s, jnp.float32(0.0))
    new_c = count_ref[...] + jnp.where(nz, jnp.float32(1.0), jnp.float32(0.0))
    t_out[...] = new_t
    c_out[...] = new_c
    v_out[...] = new_t / new_c                               # 0/0 -> nan (torch-like)


def _scalar_bulk_kernel(x_ref, t_ref, c_ref, *, block_rows, steps, r_total,
                        needs_mask):
    """Fold one (block_rows, _LANE) tile of the stream into the resident
    (8, _LANE) f32 partial-sum / partial-count accumulator blocks."""
    c = pl.program_id(0)        # core (parallel) axis
    i = pl.program_id(1)        # reduction (arbitrary) axis

    @pl.when(i == 0)
    def _init():
        t_ref[...] = jnp.zeros_like(t_ref)
        c_ref[...] = jnp.zeros_like(c_ref)

    x = x_ref[...]                                           # HBM dtype (f32/bf16/...)
    xf = x.astype(jnp.float32)                               # in-kernel cast (VPU)
    nz = xf != 0.0
    if needs_mask:
        # Mask rows belonging to partial / out-of-range blocks (r_total static).
        row0 = (c * steps + i) * block_rows
        rows = row0 + jax.lax.broadcasted_iota(jnp.int32, xf.shape, 0)
        nz = jnp.logical_and(nz, rows < r_total)

    vals = jnp.where(nz, xf, jnp.float32(0.0))
    cnt = jnp.where(nz, jnp.float32(1.0), jnp.float32(0.0))

    # Tile-aligned fold down to (8, _LANE): pure elementwise VPU adds.
    g = block_rows // _ROW_QUANT
    t_ref[...] += jnp.sum(vals.reshape(g, _ROW_QUANT, _LANE), axis=0)
    c_ref[...] += jnp.sum(cnt.reshape(g, _ROW_QUANT, _LANE), axis=0)


# ----------------------------------------------------------------------------
# pallas_call wrappers
# ----------------------------------------------------------------------------

_STEP_OUT_SHAPE = tuple(jax.ShapeDtypeStruct((1, 1), jnp.float32) for _ in range(3))


@functools.partial(jax.jit, donate_argnums=(1, 2))
def _scalar_step(s, total, count):
    return pl.pallas_call(
        _scalar_step_kernel,
        out_shape=_STEP_OUT_SHAPE,
        in_specs=[pl.BlockSpec(memory_space=pltpu.MemorySpace.VMEM)] * 3,
        out_specs=tuple(pl.BlockSpec(memory_space=pltpu.MemorySpace.VMEM)
                        for _ in range(3)),
        # total -> t_out, count -> c_out updated in place (state stays on device).
        input_output_aliases={1: 0, 2: 1},
    )(s, total, count)


@functools.partial(jax.jit, static_argnames=("block_rows_max", "num_cores"))
def _scalar_bulk_partials(values, block_rows_max=_BLOCK_ROWS_MAX,
                          num_cores=_NUM_CORES):
    """Return (sum of nonzero values, count of nonzero values) as f32 scalars."""
    x = values.reshape(-1)                    # keep HBM dtype; no wrapper upcast
    m = x.shape[0]
    quant = _ROW_QUANT * _LANE
    m_pad = ((m + quant - 1) // quant) * quant
    if m_pad != m:
        # Ragged tail only: zero padding is semantically free (zeros are skipped).
        # Row-aligned streams take the reshape-only (copy-free) path.
        x = jnp.pad(x, (0, m_pad - m))
    r_total = m_pad // _LANE
    x2 = x.reshape(r_total, _LANE)

    block_rows_max = max(_ROW_QUANT, (block_rows_max // _ROW_QUANT) * _ROW_QUANT)
    block_rows = min(block_rows_max, r_total)
    n_blocks = -(-r_total // block_rows)
    n_core = num_cores if n_blocks >= num_cores else 1
    steps = -(-n_blocks // n_core)
    needs_mask = (n_core * steps * block_rows) > r_total

    kernel = functools.partial(_scalar_bulk_kernel, block_rows=block_rows,
                               steps=steps, r_total=r_total,
                               needs_mask=needs_mask)

    def x_map(c, i, steps=steps, last=n_blocks - 1):
        # Clamp so a core's spill-over steps never DMA a fully out-of-range block
        # (their contribution is killed by the in-kernel row mask).
        return (jnp.minimum(c * steps + i, last), 0)

    def acc_map(c, i):
        return (c, 0)

    t_p, c_p = pl.pallas_call(
        kernel,
        grid=(n_core, steps),
        in_specs=[pl.BlockSpec((block_rows, _LANE), x_map)],
        out_specs=(pl.BlockSpec((_ROW_QUANT, _LANE), acc_map),
                   pl.BlockSpec((_ROW_QUANT, _LANE), acc_map)),
        out_shape=(jax.ShapeDtypeStruct((n_core * _ROW_QUANT, _LANE), jnp.float32),
                   jax.ShapeDtypeStruct((n_core * _ROW_QUANT, _LANE), jnp.float32)),
        compiler_params=pltpu.CompilerParams(
            dimension_semantics=("parallel", "arbitrary")),
    )(x2)

    # Final cross-lane reduction + fold happen once, outside the hot loop.
    return jnp.sum(t_p), jnp.sum(c_p)


# ----------------------------------------------------------------------------
# Module-equivalent wrapper
# ----------------------------------------------------------------------------

class ScalarPallas:
    """Functional re-implementation of the PyTorch `Scalar` metric module."""

    def __init__(self):
        # register_buffer equivalents.
        self.total = jnp.zeros((1, 1), jnp.float32)
        self.count = jnp.zeros((1, 1), jnp.float32)

    def __call__(self, scalar):
        return self.forward(scalar)

    def forward(self, scalar):
        s = jnp.asarray(scalar, jnp.float32).reshape(1, 1)
        new_t, new_c, value = _scalar_step(s, self.total, self.count)
        self.total, self.count = new_t, new_c
        return value.reshape(1)            # matches `self.value` (shape (1,))

    def forward_many(self, scalars, block_rows_max=_BLOCK_ROWS_MAX):
        """Apply forward() to a whole stream of scalars in one tiled HBM pass."""
        t, c = _scalar_bulk_partials(jnp.asarray(scalars),
                                     block_rows_max=block_rows_max)
        self.total = self.total + t
        self.count = self.count + c
        return (self.total / self.count).reshape(1)

    @property
    def value(self):
        return (self.total / self.count).reshape(1)

    def clear(self):
        self.total = jnp.zeros((1, 1), jnp.float32)
        self.count = jnp.zeros((1, 1), jnp.float32)


# ----------------------------------------------------------------------------
# Self-test
# ----------------------------------------------------------------------------

if __name__ == "__main__":
    key = jax.random.PRNGKey(0)
    k1, k2, k3 = jax.random.split(key, 3)

    # --- per-step path (the module's literal scalar-at-a-time forward) -------
    stream = jax.random.normal(k1, (8,), dtype=jnp.float32)
    stream = stream.at[2].set(0.0).at[5].set(0.0)   # exercise the skip-zero branch

    metric = ScalarPallas()
    out = None
    for i in range(stream.shape[0]):
        out = metric(stream[i])
    out = jax.block_until_ready(out)

    total = 0.0
    count = 0.0
    for v in np.asarray(stream):
        if v != 0.0:
            count += 1.0
            total += float(v)
    ref = np.array([total / count], np.float32)
    assert np.allclose(np.asarray(out), ref, rtol=1e-5, atol=1e-6), (out, ref)
    assert np.allclose(np.asarray(metric.value), ref, rtol=1e-5, atol=1e-6)

    # --- bulk path: ragged length, multi-block, masked tail, 2-core split ----
    bulk = jax.random.normal(k2, (200_000,), dtype=jnp.float32)
    bulk = bulk.at[::7].set(0.0)

    metric2 = ScalarPallas()
    # Small block_rows_max so a small test exercises the multi-block / masked /
    # per-core paths (production default block is (512, 1024)).
    out2 = jax.block_until_ready(metric2.forward_many(bulk, block_rows_max=16))

    bnp = np.asarray(bulk)
    nz = bnp[bnp != 0.0]
    ref2 = np.array([nz.astype(np.float64).sum() / nz.size], np.float32)
    assert np.allclose(np.asarray(out2), ref2, rtol=1e-4, atol=1e-5), (out2, ref2)
    assert np.allclose(np.asarray(metric2.value), ref2, rtol=1e-4, atol=1e-5)

    # --- bulk path, default blocks, narrow (bf16) input kept narrow in HBM ---
    bulk16 = jax.random.normal(k3, (16_384,), dtype=jnp.float32).astype(jnp.bfloat16)
    bulk16 = bulk16.at[::5].set(0.0)

    metric3 = ScalarPallas()
    out3 = jax.block_until_ready(metric3.forward_many(bulk16))

    b16 = np.asarray(bulk16).astype(np.float64)
    nz16 = b16[b16 != 0.0]
    ref3 = np.array([nz16.sum() / nz16.size], np.float64)
    assert np.allclose(np.asarray(out3, dtype=np.float64), ref3,
                       rtol=1e-3, atol=1e-5), (out3, ref3)

    print("KERNEL_OK")
</pallas_src>

<mosaic_0001>
module attributes {stable_mosaic.version = 11 : i64} {
  func.func @_scalar_step_kernel(%arg0: memref<1x1xf32, #tpu.memory_space<vmem>>, %arg1: memref<1x1xf32, #tpu.memory_space<vmem>>, %arg2: memref<1x1xf32, #tpu.memory_space<vmem>>, %arg3: memref<1x1xf32, #tpu.memory_space<vmem>>, %arg4: memref<1x1xf32, #tpu.memory_space<vmem>>, %arg5: memref<1x1xf32, #tpu.memory_space<vmem>>) attributes {dimension_semantics = [], scalar_prefetch = 0 : i64, scratch_operands = 0 : i64, tpu.core_type = #tpu.core_type<tc>} {
    %c0 = arith.constant 0 : index
    %c0_0 = arith.constant 0 : index
    %0 = vector.load %arg0[%c0, %c0_0] : memref<1x1xf32, #tpu.memory_space<vmem>>, vector<1x1xf32>
    %cst = arith.constant 0.000000e+00 : f32
    %1 = vector.broadcast %cst : f32 to vector<1x1xf32>
    %2 = arith.cmpf one, %0, %1 : vector<1x1xf32>
    %c0_1 = arith.constant 0 : index
    %c0_2 = arith.constant 0 : index
    %3 = vector.load %arg1[%c0_1, %c0_2] : memref<1x1xf32, #tpu.memory_space<vmem>>, vector<1x1xf32>
    %cst_3 = arith.constant 0.000000e+00 : f32
    %4 = vector.broadcast %cst_3 : f32 to vector<1x1xf32>
    %5 = arith.select %2, %0, %4 : vector<1x1xi1>, vector<1x1xf32>
    %6 = arith.addf %3, %5 : vector<1x1xf32>
    %c0_4 = arith.constant 0 : index
    %c0_5 = arith.constant 0 : index
    %7 = vector.load %arg2[%c0_4, %c0_5] : memref<1x1xf32, #tpu.memory_space<vmem>>, vector<1x1xf32>
    %cst_6 = arith.constant 1.000000e+00 : f32
    %cst_7 = arith.constant 0.000000e+00 : f32
    %8 = vector.broadcast %cst_6 : f32 to vector<1x1xf32>
    %9 = vector.broadcast %cst_7 : f32 to vector<1x1xf32>
    %10 = arith.select %2, %8, %9 : vector<1x1xi1>, vector<1x1xf32>
    %11 = arith.addf %7, %10 : vector<1x1xf32>
    %c0_8 = arith.constant 0 : index
    %c0_9 = arith.constant 0 : index
    %12 = vector.load %arg3[%c0_8, %c0_9] : memref<1x1xf32, #tpu.memory_space<vmem>>, vector<1x1xf32>
    tpu.vector_store %arg3[%c0_8, %c0_9], %6 {strides = array<i32>} : memref<1x1xf32, #tpu.memory_space<vmem>>, vector<1x1xf32>,
    %c0_10 = arith.constant 0 : index
    %c0_11 = arith.constant 0 : index
    %13 = vector.load %arg4[%c0_10, %c0_11] : memref<1x1xf32, #tpu.memory_space<vmem>>, vector<1x1xf32>
    tpu.vector_store %arg4[%c0_10, %c0_11], %11 {strides = array<i32>} : memref<1x1xf32, #tpu.memory_space<vmem>>, vector<1x1xf32>,
    %14 = arith.divf %6, %11 : vector<1x1xf32>
    %c0_12 = arith.constant 0 : index
    %c0_13 = arith.constant 0 : index
    %15 = vector.load %arg5[%c0_12, %c0_13] : memref<1x1xf32, #tpu.memory_space<vmem>>, vector<1x1xf32>
    tpu.vector_store %arg5[%c0_12, %c0_13], %14 {strides = array<i32>} : memref<1x1xf32, #tpu.memory_space<vmem>>, vector<1x1xf32>,
    return
  }
}

</mosaic_0001>

<llo_original>
// kernel: _scalar_step.1
$region0: #{_scalar_step.1}
  #allocation0 [shape = 'u32[]', space=smem, size = 0x4, offset = 0x4, fixed_abs, tag = 'smem constant byte address 0x4 - core index']
  #allocation1 [shape = 'u32[144,128]{1,0:T(1,128)}', space=vmem, size = 0x12000, scoped, tag = 'internal scratch']
  #allocation2 [shape = 'f32[1,1]{1,0:T(1,128)S(1)}', space=vmem, size = 0x200, scoped, tag = 'scoped memory for _scalar_step.1']
  #allocation3 [shape = 'f32[1,1]{1,0:T(1,128)S(1)}', space=vmem, size = 0x200, scoped, tag = 'scoped memory for _scalar_step.1']
  #allocation4 [shape = 'f32[1,1]{1,0:T(1,128)S(1)}', space=vmem, size = 0x200, scoped, tag = 'scoped memory for _scalar_step.1']
  %s0 = inlined_call_operand.<no memory space> [shape: f32[1,1], index: 0, kind: input, shape index: {}]
  %s1 = inlined_call_operand.<no memory space> [shape: f32[1,1], index: 1, kind: input, shape index: {}, may-alias: {1,3}]
  %s2 = inlined_call_operand.<no memory space> [shape: f32[1,1], index: 2, kind: input, shape index: {}, may-alias: {2,4}]
  %s3 = inlined_call_operand.hbm [shape: f32[1,1], index: 3, kind: output, shape index: {0}, may-alias: {1,3}]
  %s4 = inlined_call_operand.hbm [shape: f32[1,1], index: 4, kind: output, shape index: {1}, may-alias: {2,4}]
  %s5 = inlined_call_operand.hbm [shape: f32[1,1], index: 5, kind: output, shape index: {2}]
  %6 = xla_tuple %s3, %s4, %s5
  %s7 = sld [smem:[#allocation0]]
  $region38: #{_scalar_step.1} parent=0
    _
  %s9 = ssub.s32 1, %s7
  %s10 = scalar_select 0, %s9, %s7
  %v11 = vstv %s0
  %12 = vst [vmem:[#allocation2] sm:$0x1] %v11
  %v13 = vstv %s1
  %14 = vst [vmem:[#allocation3] sm:$0x1] %v13
  %v15 = vstv %s2
  %16 = vst [vmem:[#allocation4] sm:$0x1] %v15
  $region1: #{_scalar_step.1} parent=0
    #allocation5 [shape = 'u8[512]{0}', space=vmem, size = 0x400, scoped, tag = 'output window, operand 0, single buffered']
    #allocation6 [shape = 's32[1]{0}', space=sflag, size = 0x4, scoped, tag = 'scoped memory for _scalar_step.1']
    #allocation7 [shape = 'u8[512]{0}', space=vmem, size = 0x400, scoped, tag = 'output window, operand 1, single buffered']
    #allocation8 [shape = 's32[1]{0}', space=sflag, size = 0x4, scoped, tag = 'scoped memory for _scalar_step.1']
    #allocation9 [shape = 'u8[512]{0}', space=vmem, size = 0x400, scoped, tag = 'output window, operand 2, single buffered']
    %17 = vsyncpa [#allocation6], 0
    %18 = vsyncpa [#allocation8], 0
    // Predicated region
    $region2: #{_scalar_step.1} parent=1 // pred_check
      _
    $region3: #{_scalar_step.1} parent=1 // pred_check_branch
      %20 = sbr.rel (0) target = $region5
    $region4: #{_scalar_step.1} parent=1 // pred_region
      _
    $region5: #{_scalar_step.1} parent=1 // pred_fallthru
      _
    // Predicated region
    $region6: #{_scalar_step.1} parent=1 // pred_check
      _
    $region7: #{_scalar_step.1} parent=1 // pred_check_branch
      %22 = sbr.rel (0) target = $region9
    $region8: #{_scalar_step.1} parent=1 // pred_region
      _
    $region9: #{_scalar_step.1} parent=1 // pred_fallthru
      _
    // Predicated region
    $region10: #{_scalar_step.1} parent=1 // pred_check
      _
    $region11: #{_scalar_step.1} parent=1 // pred_check_branch
      %24 = sbr.rel (0) target = $region13
    $region12: #{_scalar_step.1} parent=1 // pred_region
      _
    $region13: #{_scalar_step.1} parent=1 // pred_fallthru
      _
    %v25 = vld [vmem:[#allocation2] sm:$0x1]
    %vm26 = vcmp.ne.f32.partialorder %v25, 0.0
    %v27 = vld [vmem:[#allocation3] sm:$0x1]
    %v28 = vsel %vm26, %v25, 0.0
    %v29 = vadd.f32 %v27, %v28
    %v30 = vld [vmem:[#allocation4] sm:$0x1]
    %v31 = vsel %vm26, 1.0, 0.0
    %v32 = vadd.f32 %v30, %v31
    %vm33 = vcmask 0
    %34 = vst.msk [vmem:[#allocation5] sm:$0x1] %vm33, %v29
    %35 = vst.msk [vmem:[#allocation7] sm:$0x1] %vm33, %v32
    %v36 = vrcp.pop %v32
    %v37 = vmul.f32 %v29, %v36
    %38 = vst.msk [vmem:[#allocation9] sm:$0x1] %vm33, %v37
    // Predicated region
    $region14: #{_scalar_step.1} parent=1 // pred_check
      _
    $region15: #{_scalar_step.1} parent=1 // pred_check_branch
      %40 = sbr.rel (0) target = $region17
    $region16: #{_scalar_step.1} parent=1 // pred_region
      %s42 = ssub.s32 16, 16
      %43 = vsyncadd [#allocation6], %s42
      %s45 = sshll.u32 [#allocation5], 4
      %s46 = int_to_ptr.vmem [resolvable:$true] %s45
      %48 = dma.vmem_to_hbm [thread:$0]  %s46, 16, %s3, [#allocation6]
    $region17: #{_scalar_step.1} parent=1 // pred_fallthru
      _
    // Predicated region
    $region18: #{_scalar_step.1} parent=1 // pred_check
      _
    $region19: #{_scalar_step.1} parent=1 // pred_check_branch
      %50 = sbr.rel (0) target = $region21
    $region20: #{_scalar_step.1} parent=1 // pred_region
      %s52 = ssub.s32 16, 16
      %53 = vsyncadd [#allocation8], %s52
      %s55 = sshll.u32 [#allocation7], 4
      %s56 = int_to_ptr.vmem [resolvable:$true] %s55
      %58 = dma.vmem_to_hbm [thread:$0]  %s56, 16, %s4, [#allocation8]
    $region21: #{_scalar_step.1} parent=1 // pred_fallthru
      _
    // Predicated region
    $region22: #{_scalar_step.1} parent=1 // pred_check
      _
    $region23: #{_scalar_step.1} parent=1 // pred_check_branch
      %60 = sbr.rel (0) target = $region25
    $region24: #{_scalar_step.1} parent=1 // pred_region
      %s62 = ssub.s32 16, 16
      %63 = vsyncadd [#allocation8], %s62
      %s65 = sshll.u32 [#allocation9], 4
      %s66 = int_to_ptr.vmem [resolvable:$true] %s65
      %68 = dma.vmem_to_hbm [thread:$0]  %s66, 16, %s5, [#allocation8]
    $region25: #{_scalar_step.1} parent=1 // pred_fallthru
      _
    // Predicated region
    $region26: #{_scalar_step.1} parent=1 // pred_check
      _
    $region27: #{_scalar_step.1} parent=1 // pred_check_branch
      %70 = sbr.rel (0) target = $region29
    $region28: #{_scalar_step.1} parent=1 // pred_region
      %71 = dma.done [#allocation6], 16
    $region29: #{_scalar_step.1} parent=1 // pred_fallthru
      _
    // Predicated region
    $region30: #{_scalar_step.1} parent=1 // pred_check
      _
    $region31: #{_scalar_step.1} parent=1 // pred_check_branch
      %73 = sbr.rel (0) target = $region33
    $region32: #{_scalar_step.1} parent=1 // pred_region
      %74 = dma.done [#allocation8], 16
    $region33: #{_scalar_step.1} parent=1 // pred_fallthru
      _
    // Predicated region
    $region34: #{_scalar_step.1} parent=1 // pred_check
      _
    $region35: #{_scalar_step.1} parent=1 // pred_check_branch
      %76 = sbr.rel (0) target = $region37
    $region36: #{_scalar_step.1} parent=1 // pred_region
      %77 = dma.done [#allocation8], 16
    $region37: #{_scalar_step.1} parent=1 // pred_fallthru
      _
    %78 = vsyncpa [#allocation6], 1
    %79 = vsyncpa [#allocation8], 1

</llo_original>
